<compile_context>
chip_gen: v5e
topology: v5e:2x2
jax: 0.10.0
libtpu: 0.0.40
codegen_flags: <defaults>
</compile_context>

<pallas_src>
import functools

import jax
import jax.numpy as jnp
import numpy as np
from jax.experimental import pallas as pl
from jax.experimental.pallas import tpu as pltpu

_EPS = 1e-5   # nn.BatchNorm1d default eps


# ------------------------------------------------------------------ in-kernel helpers
def _tap(h, s, L):
    """g[..., l] = h[..., l+s] when 0 <= l+s < L else 0 (conv 'same' zero padding).

    Built with a static lane slice + zero fill (cheap lane shifts); the length axis is
    per batch element in this layout, so there is no cross-batch leakage."""
    if s == 0:
        return h
    z = jnp.zeros(h.shape[:-1] + (abs(s),), h.dtype)
    if s > 0:
        return jnp.concatenate([h[..., s:], z], axis=-1)
    return jnp.concatenate([z, h[..., :L + s]], axis=-1)


def _conv_same(h_bf16, w_ref, K, L):
    """sum_t W[t] @ tap_t(h), accumulated in f32.

    h_bf16: (bt, Cin, L) bf16, w_ref: (K, Cout, Cin) bf16 -> (bt, Cout, L) f32.
    Each tap is one batched MXU matmul (bf16 operands, f32 accumulation); no K-wide
    im2col slab is materialized."""
    bt = h_bf16.shape[0]
    _, cout, cin = w_ref.shape
    pad = (K - 1) // 2
    acc = None
    for t in range(K):
        tap = _tap(h_bf16, t - pad, L)
        wt = jnp.broadcast_to(w_ref[t][None], (bt, cout, cin))
        y_t = jnp.einsum("boc,bcl->bol", wt, tap,
                         preferred_element_type=jnp.float32)
        acc = y_t if acc is None else acc + y_t
    return acc


def _merged_stats(y):
    """Per-channel [sum, sum-of-squares] of a (bt, C, L) f32 tile -> (1, C, 2)."""
    s = jnp.sum(jnp.sum(y, axis=0), axis=-1, keepdims=True)
    ss = jnp.sum(jnp.sum(y * y, axis=0), axis=-1, keepdims=True)
    return jnp.concatenate([s, ss], axis=-1)[None]


# --------------------------------------------------------------------------- kernels
def _chan_stats_kernel(x_ref, stats_ref):
    """BN1 batch statistics of one (bt, Cin, L) tile of x."""
    stats_ref[...] = _merged_stats(x_ref[...])


def _bn_relu_conv_kernel(scale_ref, shift_ref, w_ref, b_ref, x_ref,
                         h2_ref, stats_ref, *, K, L):
    """h2 = conv1d_same(relu(x*scale + shift)); also emits BN2 partial statistics
    (computed on the f32 value before the bf16 store)."""
    h = jnp.maximum(x_ref[...] * scale_ref[...][None] + shift_ref[...][None], 0.0)
    y = _conv_same(h.astype(jnp.bfloat16), w_ref, K, L) + b_ref[...][None]
    h2_ref[...] = y.astype(h2_ref.dtype)              # bf16 intermediate
    stats_ref[...] = _merged_stats(y)


def _bn_relu_conv_res_kernel(*refs, K, L, fuse_proj):
    """out = conv1d_same(relu(h2*scale + shift)) + shortcut(x).

    With fuse_proj the 1x1 projection is one extra batched matmul on x (its bias is
    pre-folded into b); otherwise the identity shortcut is a plain exact f32 add."""
    if fuse_proj:
        scale_ref, shift_ref, w_ref, b_ref, pw_ref, h2_ref, x_ref, out_ref = refs
    else:
        scale_ref, shift_ref, w_ref, b_ref, h2_ref, x_ref, out_ref = refs
    h2 = h2_ref[...].astype(jnp.float32)
    h = jnp.maximum(h2 * scale_ref[...][None] + shift_ref[...][None], 0.0)
    y = _conv_same(h.astype(jnp.bfloat16), w_ref, K, L) + b_ref[...][None]
    x = x_ref[...]
    if fuse_proj:
        bt = x.shape[0]
        pw = jnp.broadcast_to(pw_ref[...][None], (bt,) + pw_ref.shape)
        y = y + jnp.einsum("boc,bcl->bol", pw, x.astype(jnp.bfloat16),
                           preferred_element_type=jnp.float32)
    else:
        y = y + x                                      # identity shortcut
    out_ref[...] = y.astype(out_ref.dtype)


# ---------------------------------------------------------------------- wrapper utils
def _vmem_budgets():
    """Generation-aware (vmem_limit_bytes, per-tile working-set budget)."""
    try:
        phys = int(pltpu.get_tpu_info().vmem_capacity_bytes)
    except Exception:                                  # unknown part / interpret mode
        phys = 64 * 1024 * 1024
    if phys >= 100 * 1024 * 1024:                      # v5e / v6e: 128 MiB physical
        return 96 * 1024 * 1024, 32 * 1024 * 1024
    return 48 * 1024 * 1024, 16 * 1024 * 1024          # v7x: 64 MiB per TensorCore


def _pick_block_batches(B, Cin, Cout, L, requested, budget):
    """Largest batch tile within the budget that still leaves >= 2 grid steps
    (so dimension_semantics=('parallel',) can shard work across v7x's two cores)."""
    cands = [bt for bt in range(1, B + 1) if B % bt == 0]
    if requested is not None:
        bt = int(requested)
        if bt not in cands:
            raise ValueError(f"block_batches={requested} must divide batch {B}")
        return bt
    # Per-batch-element working set of the heaviest pass (pass 3): double-buffered DMA
    # operands (x f32 in, h2 bf16 in, out f32 out) + in-kernel intermediates (relu'd
    # activation f32/bf16, one lazily built tap, f32 accumulator + matmul result).
    bytes_per_b = L * (2 * (4 * Cin + 2 * Cout + 4 * Cout) + 4 * Cin + 16 * Cout)
    fitting = [bt for bt in cands if bt * bytes_per_b <= budget] or [1]
    # TODO(synk): add an L-tiling path with K-1 halo columns for very long L where even
    # a single batch element exceeds the budget; currently falls back to bt=1 tiles.
    multi = [bt for bt in fitting if B // bt >= 2]
    return max(multi) if multi else max(fitting)


def _bn_affine(stats, n, gamma, beta):
    """Fold training-mode BatchNorm statistics into per-channel scale / shift."""
    s = jnp.sum(stats[:, :, 0], axis=0)
    ss = jnp.sum(stats[:, :, 1], axis=0)
    mean = s / n
    var = jnp.maximum(ss / n - mean * mean, 0.0)       # clamp against cancellation
    scale = jnp.asarray(gamma, jnp.float32) * jax.lax.rsqrt(var + _EPS)
    shift = jnp.asarray(beta, jnp.float32) - mean * scale
    return scale.reshape(-1, 1), shift.reshape(-1, 1)


# ------------------------------------------------------------------------ forward pass
def resblock_forward(x, params, *, block_batches=None):
    """ResBlock forward. x: (B, Cin, L) float32 -> (B, Cout, L) float32."""
    B, Cin, L = x.shape
    x = jnp.asarray(x, jnp.float32)
    w1 = jnp.asarray(params["conv1_w"], jnp.float32)          # (Cout, Cin, K)
    w2 = jnp.asarray(params["conv2_w"], jnp.float32)          # (Cout, Cout, K)
    Cout, _, K = w1.shape
    assert K % 2 == 1, "padding='same' handled for odd kernel sizes (stride == 1)"
    fuse_proj = "proj_w" in params
    if not fuse_proj:
        assert Cin == Cout, "identity shortcut requires in_channels == out_channels"

    vmem_limit, budget = _vmem_budgets()
    bt = _pick_block_batches(B, Cin, Cout, L, block_batches, budget)
    nb = B // bt
    N = B * L

    cparams = pltpu.CompilerParams(dimension_semantics=("parallel",),
                                   vmem_limit_bytes=vmem_limit)
    col = lambda v: jnp.asarray(v, jnp.float32).reshape(-1, 1)

    # --------------------------- pass 1: BN1 batch statistics -----------------------
    stats1 = pl.pallas_call(
        _chan_stats_kernel,
        grid=(nb,),
        in_specs=[pl.BlockSpec((bt, Cin, L), lambda i: (i, 0, 0))],
        out_specs=pl.BlockSpec((1, Cin, 2), lambda i: (i, 0, 0)),
        out_shape=jax.ShapeDtypeStruct((nb, Cin, 2), jnp.float32),
        compiler_params=cparams,
    )(x)
    scale1, shift1 = _bn_affine(stats1, N, params["bn1_g"], params["bn1_b"])

    # -------------------- pass 2: bn1 + relu + conv1 (+ BN2 stats) ------------------
    w1b = jnp.transpose(w1, (2, 0, 1)).astype(jnp.bfloat16)   # (K, Cout, Cin)
    h2, stats2 = pl.pallas_call(
        functools.partial(_bn_relu_conv_kernel, K=K, L=L),
        grid=(nb,),
        in_specs=[pl.BlockSpec((Cin, 1), lambda i: (0, 0)),          # BN1 scale
                  pl.BlockSpec((Cin, 1), lambda i: (0, 0)),          # BN1 shift
                  pl.BlockSpec((K, Cout, Cin), lambda i: (0, 0, 0)), # conv1 weight
                  pl.BlockSpec((Cout, 1), lambda i: (0, 0)),         # conv1 bias
                  pl.BlockSpec((bt, Cin, L), lambda i: (i, 0, 0))],  # x tile
        out_specs=(pl.BlockSpec((bt, Cout, L), lambda i: (i, 0, 0)),
                   pl.BlockSpec((1, Cout, 2), lambda i: (i, 0, 0))),
        out_shape=(jax.ShapeDtypeStruct((B, Cout, L), jnp.bfloat16),  # bf16 h2
                   jax.ShapeDtypeStruct((nb, Cout, 2), jnp.float32)),
        compiler_params=cparams,
    )(scale1, shift1, w1b, col(params["conv1_b"]), x)
    scale2, shift2 = _bn_affine(stats2, N, params["bn2_g"], params["bn2_b"])

    # ------------- pass 3: bn2 + relu + conv2 + residual (projection fused) ---------
    # TODO(synk): when Cout*B*L*2 bytes of h2 fits VMEM, fuse passes 2-3 into one
    # two-phase pallas_call keeping h2 resident in VMEM (drops its HBM round trip).
    w2b = jnp.transpose(w2, (2, 0, 1)).astype(jnp.bfloat16)   # (K, Cout, Cout)
    in_specs = [pl.BlockSpec((Cout, 1), lambda i: (0, 0)),          # BN2 scale
                pl.BlockSpec((Cout, 1), lambda i: (0, 0)),          # BN2 shift
                pl.BlockSpec((K, Cout, Cout), lambda i: (0, 0, 0)), # conv2 weight
                pl.BlockSpec((Cout, 1), lambda i: (0, 0))]          # bias (+proj bias)
    if fuse_proj:
        bias = col(params["conv2_b"]) + col(params["proj_b"])
        pw = jnp.asarray(params["proj_w"], jnp.float32)[:, :, 0].astype(jnp.bfloat16)
        args = [scale2, shift2, w2b, bias, pw]
        in_specs.append(pl.BlockSpec((Cout, Cin), lambda i: (0, 0)))  # 1x1 proj weight
    else:
        args = [scale2, shift2, w2b, col(params["conv2_b"])]
    args += [h2, x]
    in_specs += [pl.BlockSpec((bt, Cout, L), lambda i: (i, 0, 0)),    # h2 tile (bf16)
                 pl.BlockSpec((bt, Cin, L), lambda i: (i, 0, 0))]     # x tile (residual)
    # TODO(synk): if DMA latency is exposed on v7x, set pipeline_mode=pl.Buffered(3) on
    # the activation BlockSpecs above.
    out = pl.pallas_call(
        functools.partial(_bn_relu_conv_res_kernel, K=K, L=L, fuse_proj=fuse_proj),
        grid=(nb,),
        in_specs=in_specs,
        out_specs=pl.BlockSpec((bt, Cout, L), lambda i: (i, 0, 0)),
        out_shape=jax.ShapeDtypeStruct((B, Cout, L), jnp.float32),
        compiler_params=cparams,
    )(*args)
    return out


# ----------------------------- pure-JAX reference -----------------------------
def resblock_ref(x, params):
    def bn(h, g, b):
        m = h.mean(axis=(0, 2), keepdims=True)
        v = ((h - m) ** 2).mean(axis=(0, 2), keepdims=True)
        return (h - m) / jnp.sqrt(v + _EPS) * g[None, :, None] + b[None, :, None]

    def conv(h, w, b, pad):
        y = jax.lax.conv_general_dilated(
            h, w, (1,), [(pad, pad)],
            dimension_numbers=("NCH", "OIH", "NCH"),
            precision=jax.lax.Precision.HIGHEST)
        return y + b[None, :, None]

    K = params["conv1_w"].shape[-1]
    pad = (K - 1) // 2
    h = jax.nn.relu(bn(x, params["bn1_g"], params["bn1_b"]))
    h = conv(h, params["conv1_w"], params["conv1_b"], pad)
    h = jax.nn.relu(bn(h, params["bn2_g"], params["bn2_b"]))
    h = conv(h, params["conv2_w"], params["conv2_b"], pad)
    if "proj_w" in params:
        sc = conv(x, params["proj_w"], params["proj_b"], 0)
    else:
        sc = x
    return h + sc


def init_params(key, Cin, Cout, K, use_proj):
    ks = jax.random.split(key, 10)
    p = {
        "bn1_g": jax.random.uniform(ks[0], (Cin,), jnp.float32, 0.5, 1.5),
        "bn1_b": 0.1 * jax.random.normal(ks[1], (Cin,), jnp.float32),
        "bn2_g": jax.random.uniform(ks[2], (Cout,), jnp.float32, 0.5, 1.5),
        "bn2_b": 0.1 * jax.random.normal(ks[3], (Cout,), jnp.float32),
        "conv1_w": 0.2 * jax.random.normal(ks[4], (Cout, Cin, K), jnp.float32),
        "conv1_b": 0.1 * jax.random.normal(ks[5], (Cout,), jnp.float32),
        "conv2_w": 0.2 * jax.random.normal(ks[6], (Cout, Cout, K), jnp.float32),
        "conv2_b": 0.1 * jax.random.normal(ks[7], (Cout,), jnp.float32),
    }
    if use_proj:
        p["proj_w"] = 0.3 * jax.random.normal(ks[8], (Cout, Cin, 1), jnp.float32)
        p["proj_b"] = 0.1 * jax.random.normal(ks[9], (Cout,), jnp.float32)
    return p


if __name__ == "__main__":
    # NOTE: PyTorch BatchNorm's running_mean/running_var buffer updates (a training-
    # mode side effect) are not reproduced; they do not affect the forward output.
    # Tolerances account for bf16 MXU operands and the bf16 h2 intermediate (the
    # reference is full-f32 / Precision.HIGHEST).
    key = jax.random.PRNGKey(0)
    k1, k2, k3, k4 = jax.random.split(key, 4)

    # Case 1: ResBlock(4 -> 8, kernel_size=3, stride=1) — projection shortcut,
    # explicit 2-batch tiles so the grid / partial-stat accumulation path is exercised.
    B, Cin, Cout, L, K = 4, 4, 8, 128, 3
    x = jax.random.normal(k1, (B, Cin, L), jnp.float32)
    params = init_params(k2, Cin, Cout, K, use_proj=(Cin != Cout))
    out = jax.block_until_ready(resblock_forward(x, params, block_batches=2))
    ref = jax.block_until_ready(resblock_ref(x, params))
    assert out.shape == (B, Cout, L)
    np.testing.assert_allclose(np.asarray(out), np.asarray(ref), rtol=2e-2, atol=3e-2)

    # Case 2: ResBlock(8 -> 8) — identity shortcut (no projection matmul).
    B2, C2, L2 = 2, 8, 128
    x_id = jax.random.normal(k3, (B2, C2, L2), jnp.float32)
    params_id = init_params(k4, C2, C2, K, use_proj=False)
    out_id = jax.block_until_ready(resblock_forward(x_id, params_id))
    ref_id = jax.block_until_ready(resblock_ref(x_id, params_id))
    np.testing.assert_allclose(np.asarray(out_id), np.asarray(ref_id), rtol=2e-2, atol=3e-2)

    print("KERNEL_OK")
</pallas_src>

<mosaic_0001>
module attributes {stable_mosaic.version = 11 : i64} {
  func.func @_chan_stats_kernel(%arg0: i32, %arg1: memref<2x4x128xf32, #tpu.memory_space<vmem>>, %arg2: memref<1x4x2xf32, #tpu.memory_space<vmem>>) attributes {dimension_semantics = [#tpu.dimension_semantics<parallel>], iteration_bounds = array<i64: 2>, scalar_prefetch = 0 : i64, scratch_operands = 0 : i64, tpu.core_type = #tpu.core_type<tc>, window_params = [{transform_indices = @transform_0, window_bounds = array<i64: 2, 4, 128>}, {transform_indices = @transform_1, window_bounds = array<i64: 1, 4, 2>}]} {
    %c0 = arith.constant 0 : index
    %c0_0 = arith.constant 0 : index
    %c0_1 = arith.constant 0 : index
    %0 = vector.load %arg1[%c0, %c0_0, %c0_1] : memref<2x4x128xf32, #tpu.memory_space<vmem>>, vector<2x4x128xf32>
    %cst = arith.constant dense<0.000000e+00> : vector<4x128xf32>
    %1 = vector.multi_reduction <add>, %0, %cst [0] : vector<2x4x128xf32> to vector<4x128xf32>
    %cst_2 = arith.constant dense<0.000000e+00> : vector<4xf32>
    %2 = vector.multi_reduction <add>, %1, %cst_2 [1] : vector<4x128xf32> to vector<4xf32>
    %3 = vector.shape_cast %2 : vector<4xf32> to vector<4x1xf32>
    %4 = arith.mulf %0, %0 : vector<2x4x128xf32>
    %cst_3 = arith.constant dense<0.000000e+00> : vector<4x128xf32>
    %5 = vector.multi_reduction <add>, %4, %cst_3 [0] : vector<2x4x128xf32> to vector<4x128xf32>
    %cst_4 = arith.constant dense<0.000000e+00> : vector<4xf32>
    %6 = vector.multi_reduction <add>, %5, %cst_4 [1] : vector<4x128xf32> to vector<4xf32>
    %7 = vector.shape_cast %6 : vector<4xf32> to vector<4x1xf32>
    %8 = tpu.concatenate %3, %7 in 1 : vector<4x1xf32>, vector<4x1xf32> -> vector<4x2xf32>
    %9 = vector.shape_cast %8 : vector<4x2xf32> to vector<1x4x2xf32>
    %c0_5 = arith.constant 0 : index
    %c0_6 = arith.constant 0 : index
    %c0_7 = arith.constant 0 : index
    %10 = vector.load %arg2[%c0_5, %c0_6, %c0_7] : memref<1x4x2xf32, #tpu.memory_space<vmem>>, vector<1x4x2xf32>
    tpu.vector_store %arg2[%c0_5, %c0_6, %c0_7], %9 {strides = array<i32>} : memref<1x4x2xf32, #tpu.memory_space<vmem>>, vector<1x4x2xf32>,
    return
  }
  func.func @transform_0(%arg0: i32) -> (i32, i32, i32) {
    %c0_i32 = arith.constant 0 : i32
    %c0_i32_0 = arith.constant 0 : i32
    %c0_i32_1 = arith.constant 0 : i32
    return %arg0, %c0_i32, %c0_i32_0 : i32, i32, i32
  }
  func.func @transform_1(%arg0: i32) -> (i32, i32, i32) {
    %c0_i32 = arith.constant 0 : i32
    %c0_i32_0 = arith.constant 0 : i32
    %c0_i32_1 = arith.constant 0 : i32
    return %arg0, %c0_i32, %c0_i32_0 : i32, i32, i32
  }
}

</mosaic_0001>

<llo_original>
// kernel: tpu_custom_call.1
$region0: #{tpu_custom_call.1}
  #allocation0 [shape = 'u32[]', space=smem, size = 0x4, offset = 0x4, fixed_abs, tag = 'smem constant byte address 0x4 - core index']
  #allocation1 [shape = 'u32[72,128]{1,0:T(1,128)}', space=vmem, size = 0x9000, scoped, tag = 'internal scratch']
  %s0 = inlined_call_operand.hbm [shape: f32[4,4,128], index: 0, kind: input, shape index: {}]
  %s1 = inlined_call_operand.vmem [shape: f32[2,4,2], index: 1, kind: output, shape index: {}]
  %s2 = sld [smem:[#allocation0]]
  $region41: #{tpu_custom_call.1} parent=0
    _
  %s4 = ssub.s32 1, %s2
  %s5 = scalar_select 0, %s4, %s2
  $region1: #{tpu_custom_call.1} parent=0
    #allocation2 [shape = 'u8[8192]{0}', space=vmem, size = 0x2000, scoped, tag = 'input window, operand 0']
    #allocation3 [shape = 's32[2]{0}', space=sflag, size = 0x8, scoped, tag = 'scoped memory for tpu_custom_call.1']
    %6 = vsyncpa [#allocation3], 0
    %s7 = scalar_lea.sflag [#allocation3], 1
    %8 = vsyncpa %s7, 0
    loop: start=0, step=1, limit=4
    $region2: #{tpu_custom_call.1} parent=1 // loop_pre_header
      _
    $region3: #{tpu_custom_call.1} parent=1 // loop_header
      %s10 = sphi 0, %s14
      %p11 = scmp.ge.s32.totalorder %s10, 4
      %s20 = sphi 0, %s22
      %s23 = sphi 0, %s20
      %s24 = sphi 0, %s23
      %s40 = sphi 0, %s24
      %s46 = sphi 0, %s48
      %s49 = sphi 0, %s46
      %s50 = sphi 0, %s49
      %s66 = sphi 0, %s50
    $region4: #{tpu_custom_call.1} parent=1 // loop_header_branch
      %13 = sbr.rel (%p11) target = $region8
    $region5: #{tpu_custom_call.1} parent=1 // loop_body
      %s15 = ssub.s32 %s10, 1
      %s16 = ssub.s32 %s10, 2
      %s17 = sadd.s32 %s10, 1
      %s18 = ssub.s32 %s10, %s17
      %p19 = scmp.eq.s32.totalorder %s18, 0
      %s21 = sadd.s32 %s20, 1
      %s22 = scalar_select %p19, %s20, %s21
      %p25 = pneg %p19
      %p26 = scmp.eq.s32.totalorder %s10, 1
      %p27 = por %p25, %p26
      %p28 = scmp.ne.s32.totalorder %s20, %s23
      %p29 = scmp.eq.s32.totalorder %s10, 0
      %p30 = por %p28, %p29
      %p31 = scmp.ne.s32.totalorder %s20, %s23
      %p32 = scmp.eq.s32.totalorder %s15, 1
      %p33 = por %p31, %p32
      %p34 = scmp.ne.s32.totalorder %s23, %s24
      %p35 = scmp.eq.s32.totalorder %s15, 0
      %p36 = por %p34, %p35
      %p37 = scmp.ne.s32.totalorder %s23, %s24
      %p38 = scmp.eq.s32.totalorder %s16, 1
      %p39 = por %p37, %p38
      %p41 = scmp.ne.s32.totalorder %s24, %s40
      %p42 = scmp.eq.s32.totalorder %s16, 0
      %p43 = por %p41, %p42
      %s44 = ssub.s32 %s10, %s17
      %p45 = scmp.eq.s32.totalorder %s44, 0
      %s47 = sadd.s32 %s46, 1
      %s48 = scalar_select %p45, %s46, %s47
      %p51 = pneg %p45
      %p52 = scmp.eq.s32.totalorder %s10, 1
      %p53 = por %p51, %p52
      %p54 = scmp.ne.s32.totalorder %s46, %s49
      %p55 = scmp.eq.s32.totalorder %s10, 0
      %p56 = por %p54, %p55
      %p57 = scmp.ne.s32.totalorder %s46, %s49
      %p58 = scmp.eq.s32.totalorder %s15, 1
      %p59 = por %p57, %p58
      %p60 = scmp.ne.s32.totalorder %s49, %s50
      %p61 = scmp.eq.s32.totalorder %s15, 0
      %p62 = por %p60, %p61
      %p63 = scmp.ne.s32.totalorder %s49, %s50
      %p64 = scmp.eq.s32.totalorder %s16, 1
      %p65 = por %p63, %p64
      %p67 = scmp.ne.s32.totalorder %s50, %s66
      %p68 = scmp.eq.s32.totalorder %s16, 0
      %p69 = por %p67, %p68
      %p70 = scmp.le.s32.totalorder 1, %s10
      %p71 = scmp.lt.s32.totalorder %s10, 3
      %p72 = pnand %p70, %p71
      %p73 = pneg %p72
      // Predicated region
      $region9: #{tpu_custom_call.1} parent=5 // pred_check
        _
      $region10: #{tpu_custom_call.1} parent=5 // pred_check_branch
        %75 = sbr.rel (%p72) target = $region12
      $region11: #{tpu_custom_call.1} parent=5 // pred_region
        %s76 = ssub.s32 %s10, 1
      $region12: #{tpu_custom_call.1} parent=5 // pred_fallthru
        _
      %p77 = scmp.lt.s32.totalorder %s10, 2
      // Predicated region
      $region13: #{tpu_custom_call.1} parent=5 // pred_check
        %p78 = pneg %p77
      $region14: #{tpu_custom_call.1} parent=5 // pred_check_branch
        %80 = sbr.rel (%p78) target = $region16
      $region15: #{tpu_custom_call.1} parent=5 // pred_region
        // Predicated region
        $region17: #{tpu_custom_call.1} parent=15 // pred_check
          %p81 = pneg %p30
        $region18: #{tpu_custom_call.1} parent=15 // pred_check_branch
          %83 = sbr.rel (%p81) target = $region20
        $region19: #{tpu_custom_call.1} parent=15 // pred_region
          %s84 = sand.u32 %s20, 1
          %s85 = scalar_lea.sflag [#allocation3], %s84
          %s86 = sand.u32 %s20, 1
          %s87 = smul.addr %s86, 8
          %s88 = scalar_lea.vmem [#allocation2], %s87
          %s89 = smul.u32 2, %s10
          %91 = vsyncadd %s85, 0
          %s92 = smul.addr %s89, 4
          %s93 = scalar_lea.hbm %s0, %s92
          %s94 = sshll.u32 %s93, 4
          %s95 = int_to_ptr.hbm [resolvable:$true] %s94
          %s96 = sshll.u32 %s88, 4
          %s97 = int_to_ptr.vmem [resolvable:$true] %s96
          %102 = dma.hbm_to_vmem [thread:$0]  %s95, 128, %s97, %s85, 64, 64, 4
        $region20: #{tpu_custom_call.1} parent=15 // pred_fallthru
          _
      $region16: #{tpu_custom_call.1} parent=5 // pred_fallthru
        _
      %p103 = scmp.le.s32.totalorder 1, %s10
      %p104 = scmp.lt.s32.totalorder %s10, 3
      %p105 = pnand %p103, %p104
      %p106 = pneg %p105
      // Predicated region
      $region21: #{tpu_custom_call.1} parent=5 // pred_check
        _
      $region22: #{tpu_custom_call.1} parent=5 // pred_check_branch
        %108 = sbr.rel (%p105) target = $region24
      $region23: #{tpu_custom_call.1} parent=5 // pred_region
        %s109 = ssub.s32 %s10, 1
        %s110 = sand.u32 %s23, 1
        %s111 = scalar_lea.sflag [#allocation3], %s110
        %s112 = sand.u32 %s23, 1
        %s113 = smul.addr %s112, 8
        %s114 = scalar_lea.vmem [#allocation2], %s113
        // Predicated region
        $region25: #{tpu_custom_call.1} parent=23 // pred_check
          %p115 = pneg %p36
        $region26: #{tpu_custom_call.1} parent=23 // pred_check_branch
          %117 = sbr.rel (%p115) target = $region28
        $region27: #{tpu_custom_call.1} parent=23 // pred_region
          %119 = dma.done %s111, 128
        $region28: #{tpu_custom_call.1} parent=23 // pred_fallthru
          _
        %s120 = sand.u32 %s23, 1
        %s121 = scalar_lea.sflag [#allocation3], %s120
        %s122 = sand.u32 %s23, 1
        %s123 = smul.addr %s122, 8
        %s124 = scalar_lea.vmem [#allocation2], %s123
        %p125 = pneg %p36
        %p126 = pneg %p33
        %p127 = pneg %p62
        %p128 = pneg %p59
        %p129 = scmp.lt.s32.totalorder %s15, 1
        %s130 = scalar_select %p129, %s15, 1
        %s131 = smul.addr %s130, 4
        %s132 = scalar_lea.vmem %s1, %s131
        %s133 = smul.u32 2, %s15
        %p134 = scmp.lt.s32.totalorder %s15, 1
        %s135 = scalar_select %p134, %s15, 1
        %s136 = smul.addr %s135, 4
        %s137 = scalar_lea.vmem %s1, %s136
        %v138 = vld [vmem:[%s114] sm:$0xf]
        %v139 = vld [vmem:[%s114 + $0x4] sm:$0xf]
        %vm140 = vcmask 1043456
        %v141 = vsel %vm140, %v138, 0.0
        %v142 = vsel %vm140, %v139, 0.0
        %v143 = vadd.f32 %v141, %v142
        %v144 = vsel %vm140, %v143, 0.0
        %145 = vadd.xlane.f32.xlu0 %v144
        %v146 = vpop.xlane.xlu0 %145
        %v147 = vmul.f32 %v138, %v138
        %v148 = vmul.f32 %v139, %v139
        %v149 = vsel %vm140, %v147, 0.0
        %v150 = vsel %vm140, %v148, 0.0
        %v151 = vadd.f32 %v149, %v150
        %v152 = vsel %vm140, %v151, 0.0
        %153 = vadd.xlane.f32.xlu0 %v152
        %v154 = vpop.xlane.xlu0 %153
        %vm155 = vcmask 7168
        %v156 = vsel %vm155, %v146, %v154
        %vm157 = vcmask 11264
        %158 = vst.msk [vmem:[%s137] sm:$0xf] %vm157, %v156
        %p159 = scmp.lt.s32.totalorder %s15, 1
        %s160 = scalar_select %p159, %s15, 1
        %s161 = smul.addr %s160, 4
        %s162 = scalar_lea.vmem %s1, %s161
        // Predicated region
        $region29: #{tpu_custom_call.1} parent=23 // pred_check
          %p163 = pneg %p59
        $region30: #{tpu_custom_call.1} parent=23 // pred_check_branch
          %165 = sbr.rel (%p163) target = $region32
        $region31: #{tpu_custom_call.1} parent=23 // pred_region
          _
        $region32: #{tpu_custom_call.1} parent=23 // pred_fallthru
          _
      $region24: #{tpu_custom_call.1} parent=5 // pred_fallthru
        _
      %p166 = scmp.le.s32.totalorder 2, %s10
      // Predicated region
      $region33: #{tpu_custom_call.1} parent=5 // pred_check
        %p167 = pneg %p166
      $region34: #{tpu_custom_call.1} parent=5 // pred_check_branch
        %169 = sbr.rel (%p167) target = $region36
      $region35: #{tpu_custom_call.1} parent=5 // pred_region
        %s170 = ssub.s32 %s10, 2
        // Predicated region
        $region37: #{tpu_custom_call.1} parent=35 // pred_check
          %p171 = pneg %p65
        $region38: #{tpu_custom_call.1} parent=35 // pred_check_branch
          %173 = sbr.rel (%p171) target = $region40
        $region39: #{tpu_custom_call.1} parent=35 // pred_region
          %p174 = scmp.lt.s32.totalorder %s16, 1
          %s175 = scalar_select %p174, %s16, 1
          %s176 = smul.addr %s175, 4
          %s177 = scalar_lea.vmem %s1, %s176
        $region40: #{tpu_custom_call.1} parent=35 // pred_fallthru
          _
      $region36: #{tpu_custom_call.1} parent=5 // pred_fallthru
        _
    $region6: #{tpu_custom_call.1} parent=1 // loop_footer
      %s14 = sadd.s32 1, %s10
    $region7: #{tpu_custom_call.1} parent=1 // loop_footer_branch
      %9 = sbr.rel target = $region3
    $region8: #{tpu_custom_call.1} parent=1 // loop_exit
      _
    %178 = vsyncpa [#allocation3], 1
    %s179 = scalar_lea.sflag [#allocation3], 1
    %180 = vsyncpa %s179, 1

</llo_original>
